<compile_context>
chip_gen: v7x
topology: tpu7x:2x2x1
jax: 0.10.0
libtpu: 0.0.40
codegen_flags: <defaults>
</compile_context>

<pallas_src>
import jax
import jax.numpy as jnp
from jax.experimental import pallas as pl
from jax.experimental.pallas import tpu as pltpu

K = 3        # conv_transpose kernel size
PAD_W = 128  # lane-padded scratch width (>= W + 2*(K-1); one lane group)


def convt_kernel(w_ref, x_ref, o_ref, xp_ref):
    # w_ref : SMEM (9,) float32          conv_transpose weight, row-major (unflipped)
    # x_ref : VMEM (nb, 1, H, W)         input block (whole batch or one image)
    # o_ref : VMEM (nb, 1, Ho, Wo)       final NCHW output block
    # xp_ref: VMEM (nb, 1, H+2(K-1), PAD_W)  zero/lane-padded staging scratch
    nb = x_ref.shape[0]
    h, w = x_ref.shape[2], x_ref.shape[3]
    ho, wo = o_ref.shape[2], o_ref.shape[3]
    hp, pw = xp_ref.shape[2], xp_ref.shape[3]
    f32 = xp_ref.dtype

    # Fused zero padding: input first, then zero ONLY the halo that is read for
    # kept output columns.  Tap (a, b) reads row r+a / lane c+b for output
    # (r, c); with r < ho, c < wo, a,b < K this stays within rows [0, hp) and
    # lanes [0, w + 2*(K-1)).  Lanes beyond that are left uninitialized: they
    # only ever feed columns >= wo, which are never stored.
    xp_ref[:, :, K - 1:K - 1 + h, K - 1:K - 1 + w] = x_ref[...].astype(f32)
    xp_ref[:, :, 0:K - 1, :] = jnp.zeros((nb, 1, K - 1, pw), f32)
    xp_ref[:, :, h + K - 1:hp, :] = jnp.zeros((nb, 1, K - 1, pw), f32)
    xp_ref[:, :, K - 1:K - 1 + h, 0:K - 1] = jnp.zeros((nb, 1, h, K - 1), f32)
    xp_ref[:, :, K - 1:K - 1 + h, w + K - 1:w + 2 * (K - 1)] = (
        jnp.zeros((nb, 1, h, K - 1), f32))

    # Hoisted scalar taps of the 180-degree flipped weight: wf[3a+b] = w[2-a, 2-b].
    wf = [w_ref[(K * K - 1) - t] for t in range(K * K)]

    # Full correlation with the flipped kernel == ConvTranspose2d (stride 1, pad 0).
    # Accumulator seeded with tap (0, 0): no zero-materialization + extra add pass.
    acc = xp_ref[:, :, 0:ho, 0:wo] * wf[0]
    for a in range(K):
        for b in range(K):
            if a == 0 and b == 0:
                continue
            acc = acc + xp_ref[:, :, a:a + ho, b:b + wo] * wf[K * a + b]

    # Final NCHW block written directly (masked wo-lane store); nothing is left
    # for XLA to slice or reshape after the kernel.
    o_ref[...] = acc.astype(o_ref.dtype)


def _tensorcores_per_chip() -> int:
    try:
        kind = jax.devices()[0].device_kind.lower()
    except Exception:
        return 1
    return 2 if ("v7" in kind or "7x" in kind) else 1


def conv_transpose2d_1c(x, w):
    """x: (N, 1, H, W), w: (1, 1, 3, 3) -> (N, 1, H+2, W+2) (ConvTranspose2d, no bias)."""
    n, c, h, wd = x.shape
    assert c == 1 and w.shape == (1, 1, K, K)
    ho, wo = h + K - 1, wd + K - 1
    hp = h + 2 * (K - 1)
    assert wd + 2 * (K - 1) <= PAD_W, "widen PAD_W (or tile W) for larger inputs"
    # TODO(synk): if N/H grow, add a row-tiled grid with a (K-1)-row halo before the
    # whole-batch scratch (N*(H+4)*PAD_W*4 B) approaches v7x's smaller VMEM budget.

    out_shape = jax.ShapeDtypeStruct((n, 1, ho, wo), x.dtype)
    w_flat = w.reshape(K * K).astype(jnp.float32)

    if _tensorcores_per_chip() > 1 and n > 1:
        # v7x: one image per grid step; parallel axis shards images across both TCs.
        return pl.pallas_call(
            convt_kernel,
            out_shape=out_shape,
            grid=(n,),
            in_specs=[
                pl.BlockSpec(memory_space=pltpu.SMEM),                 # (9,) weight scalars
                pl.BlockSpec((1, 1, h, wd), lambda i: (i, 0, 0, 0)),   # one image
            ],
            out_specs=pl.BlockSpec((1, 1, ho, wo), lambda i: (i, 0, 0, 0)),
            scratch_shapes=[pltpu.VMEM((1, 1, hp, PAD_W), jnp.float32)],
            compiler_params=pltpu.CompilerParams(
                dimension_semantics=("parallel",)),
        )(w_flat, x)

    # v5e / v6e (single TensorCore): whole batch in one block, no grid at all
    # (removes the degenerate grid-loop scaffolding).
    return pl.pallas_call(
        convt_kernel,
        out_shape=out_shape,
        in_specs=[
            pl.BlockSpec(memory_space=pltpu.SMEM),   # (9,) weight scalars
            pl.BlockSpec(memory_space=pltpu.VMEM),   # full (N,1,H,W) input
        ],
        out_specs=pl.BlockSpec(memory_space=pltpu.VMEM),
        scratch_shapes=[pltpu.VMEM((n, 1, hp, PAD_W), jnp.float32)],
    )(w_flat, x)


def reference_conv_transpose2d(x, w):
    # lax reference: conv_transpose with HWIO weight and transpose_kernel=True.
    return jax.lax.conv_transpose(
        x, jnp.transpose(w, (2, 3, 1, 0)),  # HWIO
        strides=(1, 1), padding="VALID",
        dimension_numbers=("NCHW", "HWIO", "NCHW"),
        transpose_kernel=True,
    )


if __name__ == "__main__":
    key = jax.random.PRNGKey(0)
    kx, kw1, kb1, kw2 = jax.random.split(key, 4)

    # Input: matches the module's x1 = torch.randn(2, 1, 32, 32)
    x1 = jax.random.normal(kx, (2, 1, 32, 32), dtype=jnp.float32)

    # Deterministic parameter init (shapes from __init__).
    # conv1 weight/bias exist in the module, but v1 = conv1(x1) is dead code in forward.
    w1 = jax.random.normal(kw1, (1, 1, 3, 3), dtype=jnp.float32) * 0.1  # unused
    b1 = jax.random.normal(kb1, (1,), dtype=jnp.float32) * 0.1          # unused
    w2 = jax.random.normal(kw2, (1, 1, 3, 3), dtype=jnp.float32) * 0.1

    v2 = conv_transpose2d_1c(x1, w2)
    v2 = jax.block_until_ready(v2)

    assert v2.shape == (2, 1, 34, 34), v2.shape

    ref = reference_conv_transpose2d(x1, w2)
    assert jnp.allclose(v2, ref, atol=1e-5, rtol=1e-5), float(jnp.max(jnp.abs(v2 - ref)))

    print("KERNEL_OK")
</pallas_src>

<mosaic_0001>
module attributes {stable_mosaic.version = 11 : i64} {
  func.func @convt_kernel(%arg0: memref<9xf32, #tpu.memory_space<smem>>, %arg1: memref<2x1x32x32xf32, #tpu.memory_space<vmem>>, %arg2: memref<2x1x34x34xf32, #tpu.memory_space<vmem>>, %arg3: memref<2x1x36x128xf32, #tpu.memory_space<vmem>>) attributes {dimension_semantics = [], scalar_prefetch = 0 : i64, scratch_operands = 1 : i64, tpu.core_type = #tpu.core_type<tc>} {
    %c0 = arith.constant 0 : index
    %c0_0 = arith.constant 0 : index
    %c0_1 = arith.constant 0 : index
    %c0_2 = arith.constant 0 : index
    %0 = vector.load %arg1[%c0, %c0_0, %c0_1, %c0_2] : memref<2x1x32x32xf32, #tpu.memory_space<vmem>>, vector<2x1x32x32xf32>
    %c0_3 = arith.constant 0 : index
    %c0_4 = arith.constant 0 : index
    %c2 = arith.constant 2 : index
    %c2_5 = arith.constant 2 : index
    %1 = vector.load %arg3[%c0_3, %c0_4, %c2, %c2_5] : memref<2x1x36x128xf32, #tpu.memory_space<vmem>>, vector<2x1x32x32xf32>
    tpu.vector_store %arg3[%c0_3, %c0_4, %c2, %c2_5], %0 {strides = array<i32>} : memref<2x1x36x128xf32, #tpu.memory_space<vmem>>, vector<2x1x32x32xf32>,
    %cst = arith.constant 0.000000e+00 : f32
    %2 = vector.broadcast %cst : f32 to vector<2x1x2x128xf32>
    %c0_6 = arith.constant 0 : index
    %c0_7 = arith.constant 0 : index
    %c0_8 = arith.constant 0 : index
    %c0_9 = arith.constant 0 : index
    %3 = vector.load %arg3[%c0_6, %c0_7, %c0_8, %c0_9] : memref<2x1x36x128xf32, #tpu.memory_space<vmem>>, vector<2x1x2x128xf32>
    tpu.vector_store %arg3[%c0_6, %c0_7, %c0_8, %c0_9], %2 {strides = array<i32>} : memref<2x1x36x128xf32, #tpu.memory_space<vmem>>, vector<2x1x2x128xf32>,
    %cst_10 = arith.constant 0.000000e+00 : f32
    %4 = vector.broadcast %cst_10 : f32 to vector<2x1x2x128xf32>
    %c0_11 = arith.constant 0 : index
    %c0_12 = arith.constant 0 : index
    %c34 = arith.constant 34 : index
    %c0_13 = arith.constant 0 : index
    %5 = vector.load %arg3[%c0_11, %c0_12, %c34, %c0_13] : memref<2x1x36x128xf32, #tpu.memory_space<vmem>>, vector<2x1x2x128xf32>
    tpu.vector_store %arg3[%c0_11, %c0_12, %c34, %c0_13], %4 {strides = array<i32>} : memref<2x1x36x128xf32, #tpu.memory_space<vmem>>, vector<2x1x2x128xf32>,
    %cst_14 = arith.constant 0.000000e+00 : f32
    %6 = vector.broadcast %cst_14 : f32 to vector<2x1x32x2xf32>
    %c0_15 = arith.constant 0 : index
    %c0_16 = arith.constant 0 : index
    %c2_17 = arith.constant 2 : index
    %c0_18 = arith.constant 0 : index
    %7 = vector.load %arg3[%c0_15, %c0_16, %c2_17, %c0_18] : memref<2x1x36x128xf32, #tpu.memory_space<vmem>>, vector<2x1x32x2xf32>
    tpu.vector_store %arg3[%c0_15, %c0_16, %c2_17, %c0_18], %6 {strides = array<i32>} : memref<2x1x36x128xf32, #tpu.memory_space<vmem>>, vector<2x1x32x2xf32>,
    %cst_19 = arith.constant 0.000000e+00 : f32
    %8 = vector.broadcast %cst_19 : f32 to vector<2x1x32x2xf32>
    %c0_20 = arith.constant 0 : index
    %c0_21 = arith.constant 0 : index
    %c2_22 = arith.constant 2 : index
    %c34_23 = arith.constant 34 : index
    %9 = vector.load %arg3[%c0_20, %c0_21, %c2_22, %c34_23] : memref<2x1x36x128xf32, #tpu.memory_space<vmem>>, vector<2x1x32x2xf32>
    tpu.vector_store %arg3[%c0_20, %c0_21, %c2_22, %c34_23], %8 {strides = array<i32>} : memref<2x1x36x128xf32, #tpu.memory_space<vmem>>, vector<2x1x32x2xf32>,
    %c8 = arith.constant 8 : index
    %10 = memref.load %arg0[%c8] : memref<9xf32, #tpu.memory_space<smem>>
    %c7 = arith.constant 7 : index
    %11 = memref.load %arg0[%c7] : memref<9xf32, #tpu.memory_space<smem>>
    %c6 = arith.constant 6 : index
    %12 = memref.load %arg0[%c6] : memref<9xf32, #tpu.memory_space<smem>>
    %c5 = arith.constant 5 : index
    %13 = memref.load %arg0[%c5] : memref<9xf32, #tpu.memory_space<smem>>
    %c4 = arith.constant 4 : index
    %14 = memref.load %arg0[%c4] : memref<9xf32, #tpu.memory_space<smem>>
    %c3 = arith.constant 3 : index
    %15 = memref.load %arg0[%c3] : memref<9xf32, #tpu.memory_space<smem>>
    %c2_24 = arith.constant 2 : index
    %16 = memref.load %arg0[%c2_24] : memref<9xf32, #tpu.memory_space<smem>>
    %c1 = arith.constant 1 : index
    %17 = memref.load %arg0[%c1] : memref<9xf32, #tpu.memory_space<smem>>
    %c0_25 = arith.constant 0 : index
    %18 = memref.load %arg0[%c0_25] : memref<9xf32, #tpu.memory_space<smem>>
    %c0_26 = arith.constant 0 : index
    %c0_27 = arith.constant 0 : index
    %c0_28 = arith.constant 0 : index
    %c0_29 = arith.constant 0 : index
    %19 = vector.load %arg3[%c0_26, %c0_27, %c0_28, %c0_29] : memref<2x1x36x128xf32, #tpu.memory_space<vmem>>, vector<2x1x34x34xf32>
    %20 = vector.broadcast %10 : f32 to vector<2x1x34x34xf32>
    %21 = arith.mulf %19, %20 : vector<2x1x34x34xf32>
    %c0_30 = arith.constant 0 : index
    %c0_31 = arith.constant 0 : index
    %c0_32 = arith.constant 0 : index
    %c1_33 = arith.constant 1 : index
    %22 = vector.load %arg3[%c0_30, %c0_31, %c0_32, %c1_33] : memref<2x1x36x128xf32, #tpu.memory_space<vmem>>, vector<2x1x34x34xf32>
    %23 = vector.broadcast %11 : f32 to vector<2x1x34x34xf32>
    %24 = arith.mulf %22, %23 : vector<2x1x34x34xf32>
    %25 = arith.addf %21, %24 : vector<2x1x34x34xf32>
    %c0_34 = arith.constant 0 : index
    %c0_35 = arith.constant 0 : index
    %c0_36 = arith.constant 0 : index
    %c2_37 = arith.constant 2 : index
    %26 = vector.load %arg3[%c0_34, %c0_35, %c0_36, %c2_37] : memref<2x1x36x128xf32, #tpu.memory_space<vmem>>, vector<2x1x34x34xf32>
    %27 = vector.broadcast %12 : f32 to vector<2x1x34x34xf32>
    %28 = arith.mulf %26, %27 : vector<2x1x34x34xf32>
    %29 = arith.addf %25, %28 : vector<2x1x34x34xf32>
    %c0_38 = arith.constant 0 : index
    %c0_39 = arith.constant 0 : index
    %c1_40 = arith.constant 1 : index
    %c0_41 = arith.constant 0 : index
    %30 = vector.load %arg3[%c0_38, %c0_39, %c1_40, %c0_41] : memref<2x1x36x128xf32, #tpu.memory_space<vmem>>, vector<2x1x34x34xf32>
    %31 = vector.broadcast %13 : f32 to vector<2x1x34x34xf32>
    %32 = arith.mulf %30, %31 : vector<2x1x34x34xf32>
    %33 = arith.addf %29, %32 : vector<2x1x34x34xf32>
    %c0_42 = arith.constant 0 : index
    %c0_43 = arith.constant 0 : index
    %c1_44 = arith.constant 1 : index
    %c1_45 = arith.constant 1 : index
    %34 = vector.load %arg3[%c0_42, %c0_43, %c1_44, %c1_45] : memref<2x1x36x128xf32, #tpu.memory_space<vmem>>, vector<2x1x34x34xf32>
    %35 = vector.broadcast %14 : f32 to vector<2x1x34x34xf32>
    %36 = arith.mulf %34, %35 : vector<2x1x34x34xf32>
    %37 = arith.addf %33, %36 : vector<2x1x34x34xf32>
    %c0_46 = arith.constant 0 : index
    %c0_47 = arith.constant 0 : index
    %c1_48 = arith.constant 1 : index
    %c2_49 = arith.constant 2 : index
    %38 = vector.load %arg3[%c0_46, %c0_47, %c1_48, %c2_49] : memref<2x1x36x128xf32, #tpu.memory_space<vmem>>, vector<2x1x34x34xf32>
    %39 = vector.broadcast %15 : f32 to vector<2x1x34x34xf32>
    %40 = arith.mulf %38, %39 : vector<2x1x34x34xf32>
    %41 = arith.addf %37, %40 : vector<2x1x34x34xf32>
    %c0_50 = arith.constant 0 : index
    %c0_51 = arith.constant 0 : index
    %c2_52 = arith.constant 2 : index
    %c0_53 = arith.constant 0 : index
    %42 = vector.load %arg3[%c0_50, %c0_51, %c2_52, %c0_53] : memref<2x1x36x128xf32, #tpu.memory_space<vmem>>, vector<2x1x34x34xf32>
    %43 = vector.broadcast %16 : f32 to vector<2x1x34x34xf32>
    %44 = arith.mulf %42, %43 : vector<2x1x34x34xf32>
    %45 = arith.addf %41, %44 : vector<2x1x34x34xf32>
    %c0_54 = arith.constant 0 : index
    %c0_55 = arith.constant 0 : index
    %c2_56 = arith.constant 2 : index
    %c1_57 = arith.constant 1 : index
    %46 = vector.load %arg3[%c0_54, %c0_55, %c2_56, %c1_57] : memref<2x1x36x128xf32, #tpu.memory_space<vmem>>, vector<2x1x34x34xf32>
    %47 = vector.broadcast %17 : f32 to vector<2x1x34x34xf32>
    %48 = arith.mulf %46, %47 : vector<2x1x34x34xf32>
    %49 = arith.addf %45, %48 : vector<2x1x34x34xf32>
    %c0_58 = arith.constant 0 : index
    %c0_59 = arith.constant 0 : index
    %c2_60 = arith.constant 2 : index
    %c2_61 = arith.constant 2 : index
    %50 = vector.load %arg3[%c0_58, %c0_59, %c2_60, %c2_61] : memref<2x1x36x128xf32, #tpu.memory_space<vmem>>, vector<2x1x34x34xf32>
    %51 = vector.broadcast %18 : f32 to vector<2x1x34x34xf32>
    %52 = arith.mulf %50, %51 : vector<2x1x34x34xf32>
    %53 = arith.addf %49, %52 : vector<2x1x34x34xf32>
    %c0_62 = arith.constant 0 : index
    %c0_63 = arith.constant 0 : index
    %c0_64 = arith.constant 0 : index
    %c0_65 = arith.constant 0 : index
    %54 = vector.load %arg2[%c0_62, %c0_63, %c0_64, %c0_65] : memref<2x1x34x34xf32, #tpu.memory_space<vmem>>, vector<2x1x34x34xf32>
    tpu.vector_store %arg2[%c0_62, %c0_63, %c0_64, %c0_65], %53 {strides = array<i32>} : memref<2x1x34x34xf32, #tpu.memory_space<vmem>>, vector<2x1x34x34xf32>,
    return
  }
}

</mosaic_0001>

<llo_original>
// kernel: tpu_custom_call.1
$region0: #{tpu_custom_call.1}
  #allocation0 [shape = 'u32[]', space=smem, size = 0x4, offset = 0x4, fixed_abs, tag = 'smem constant byte address 0x4 - core index']
  #allocation1 [shape = 'u32[144,128]{1,0:T(1,128)}', space=vmem, size = 0x12000, scoped, tag = 'internal scratch']
  #allocation2 [shape = 'f32[2,1,36,128]{3,2,1,0:T(8,128)}', space=vmem, size = 0xa000, scoped, tag = 'scratch operand']
  %s0 = inlined_call_operand.hbm [shape: f32[9], index: 0, kind: input, shape index: {}]
  %s1 = inlined_call_operand.hbm [shape: f32[2,1,32,32], index: 1, kind: input, shape index: {}]
  %s2 = inlined_call_operand.vmem [shape: f32[2,1,34,34], index: 2, kind: output, shape index: {}]
  %s3 = sld [smem:[#allocation0]]
  $region26: #{tpu_custom_call.1} parent=0
    _
  %s5 = ssub.s32 1, %s3
  %s6 = scalar_select 0, %s5, %s3
  $region1: #{tpu_custom_call.1} parent=0
    #allocation3 [shape = 'u8[512]{0}', space=smem, size = 0x200, scoped, tag = 'input window, operand 0, single buffered']
    #allocation4 [shape = 's32[1]{0}', space=sflag, size = 0x4, scoped, tag = 'scoped memory for tpu_custom_call.1']
    #allocation5 [shape = 's32[1]{0}', space=sflag, size = 0x4, scoped, tag = 'scoped memory for tpu_custom_call.1']
    #allocation6 [shape = 'u8[32768]{0}', space=vmem, size = 0x8000, scoped, tag = 'input window, operand 1, single buffered']
    %7 = vsyncpa [#allocation5], 0
    %8 = vsyncpa [#allocation4], 0
    // Predicated region
    $region2: #{tpu_custom_call.1} parent=1 // pred_check
      _
    $region3: #{tpu_custom_call.1} parent=1 // pred_check_branch
      %10 = sbr.rel (0) target = $region5
    $region4: #{tpu_custom_call.1} parent=1 // pred_region
      %s12 = ssub.s32 16, 16
      %13 = vsyncadd [#allocation5], %s12
      %16 = dma.hbm_to_smem %s0, 16, [#allocation3], [#allocation5]
    $region5: #{tpu_custom_call.1} parent=1 // pred_fallthru
      _
    // Predicated region
    $region6: #{tpu_custom_call.1} parent=1 // pred_check
      _
    $region7: #{tpu_custom_call.1} parent=1 // pred_check_branch
      %18 = sbr.rel (0) target = $region9
    $region8: #{tpu_custom_call.1} parent=1 // pred_region
      %s20 = ssub.s32 1024, 1024
      %21 = vsyncadd [#allocation4], %s20
      %s22 = sshll.u32 [#allocation6], 4
      %s23 = int_to_ptr.vmem [resolvable:$true] %s22
      %28 = dma.hbm_to_vmem [thread:$0]  %s1, 1024, %s23, [#allocation4], 128, 128, 8
    $region9: #{tpu_custom_call.1} parent=1 // pred_fallthru
      _
    // Predicated region
    $region10: #{tpu_custom_call.1} parent=1 // pred_check
      _
    $region11: #{tpu_custom_call.1} parent=1 // pred_check_branch
      %30 = sbr.rel (0) target = $region13
    $region12: #{tpu_custom_call.1} parent=1 // pred_region
      %31 = dma.done [#allocation5], 16
    $region13: #{tpu_custom_call.1} parent=1 // pred_fallthru
      _
    // Predicated region
    $region14: #{tpu_custom_call.1} parent=1 // pred_check
      _
    $region15: #{tpu_custom_call.1} parent=1 // pred_check_branch
      %33 = sbr.rel (0) target = $region17
    $region16: #{tpu_custom_call.1} parent=1 // pred_region
      %34 = dma.done [#allocation4], 1024
    $region17: #{tpu_custom_call.1} parent=1 // pred_fallthru
      _
    %35 = sfence
    %v36 = vld [vmem:[#allocation6] sm:$0xff]
    %v37 = vld [vmem:[#allocation6 + $0x8] sm:$0xff]
    %v38 = vld [vmem:[#allocation6 + $0x10] sm:$0xff]
    %v39 = vld [vmem:[#allocation6 + $0x18] sm:$0xff]
    %v40 = vld [vmem:[#allocation6 + $0x20] sm:$0xff]
    %v41 = vld [vmem:[#allocation6 + $0x28] sm:$0xff]
    %v42 = vld [vmem:[#allocation6 + $0x30] sm:$0xff]
    %v43 = vld [vmem:[#allocation6 + $0x38] sm:$0xff]
    %52 = vrot.lane.b32.xlu0 %v36, 2
    %v53 = vpop.permute.xlu0 %52
    %54 = vrot.lane.b32.xlu0 %v37, 2
    %v55 = vpop.permute.xlu0 %54
    %56 = vrot.lane.b32.xlu0 %v38, 2
    %v57 = vpop.permute.xlu0 %56
    %58 = vrot.lane.b32.xlu0 %v39, 2
    %v59 = vpop.permute.xlu0 %58
    %60 = vrot.lane.b32.xlu0 %v40, 2
    %v61 = vpop.permute.xlu0 %60
    %62 = vrot.lane.b32.xlu0 %v41, 2
    %v63 = vpop.permute.xlu0 %62
    %64 = vrot.lane.b32.xlu0 %v42, 2
    %v65 = vpop.permute.xlu0 %64
    %66 = vrot.lane.b32.xlu0 %v43, 2
    %v67 = vpop.permute.xlu0 %66
    %vm76 = vcmask 277520
    %77 = vst.msk [vmem:[#allocation2 + $0x2] sm:$0xff] %vm76, %v53
    %78 = vst.msk [vmem:[#allocation2 + $0xa] sm:$0xff] %vm76, %v55
    %79 = vst.msk [vmem:[#allocation2 + $0x12] sm:$0xff] %vm76, %v57
    %80 = vst.msk [vmem:[#allocation2 + $0x1a] sm:$0xff] %vm76, %v59
    %81 = vst.msk [vmem:[#allocation2 + $0x2a] sm:$0xff] %vm76, %v61
    %82 = vst.msk [vmem:[#allocation2 + $0x32] sm:$0xff] %vm76, %v63
    %83 = vst.msk [vmem:[#allocation2 + $0x3a] sm:$0xff] %vm76, %v65
    %84 = vst.msk [vmem:[#allocation2 + $0x42] sm:$0xff] %vm76, %v67
    %85 = vst [vmem:[#allocation2] sm:$0x3] 0.0
    %86 = vst [vmem:[#allocation2 + $0x28] sm:$0x3] 0.0
    %87 = vst [vmem:[#allocation2 + $0x22] sm:$0x3] 0.0
    %88 = vst [vmem:[#allocation2 + $0x4a] sm:$0x3] 0.0
    %vm89 = vcmask 15360
    %90 = vst.msk [vmem:[#allocation2 + $0x2] sm:$0xff] %vm89, 0.0
    %91 = vst.msk [vmem:[#allocation2 + $0xa] sm:$0xff] %vm89, 0.0
    %92 = vst.msk [vmem:[#allocation2 + $0x12] sm:$0xff] %vm89, 0.0
    %93 = vst.msk [vmem:[#allocation2 + $0x1a] sm:$0xff] %vm89, 0.0
    %94 = vst.msk [vmem:[#allocation2 + $0x2a] sm:$0xff] %vm89, 0.0
    %95 = vst.msk [vmem:[#allocation2 + $0x32] sm:$0xff] %vm89, 0.0
    %96 = vst.msk [vmem:[#allocation2 + $0x3a] sm:$0xff] %vm89, 0.0
    %97 = vst.msk [vmem:[#allocation2 + $0x42] sm:$0xff] %vm89, 0.0
    %vm98 = vcmask 294160
    %99 = vst.msk [vmem:[#allocation2 + $0x2] sm:$0xff] %vm98, 0.0
    %100 = vst.msk [vmem:[#allocation2 + $0xa] sm:$0xff] %vm98, 0.0
    %101 = vst.msk [vmem:[#allocation2 + $0x12] sm:$0xff] %vm98, 0.0
    %102 = vst.msk [vmem:[#allocation2 + $0x1a] sm:$0xff] %vm98, 0.0
    %103 = vst.msk [vmem:[#allocation2 + $0x2a] sm:$0xff] %vm98, 0.0
    %104 = vst.msk [vmem:[#allocation2 + $0x32] sm:$0xff] %vm98, 0.0
    %105 = vst.msk [vmem:[#allocation2 + $0x3a] sm:$0xff] %vm98, 0.0
    %106 = vst.msk [vmem:[#allocation2 + $0x42] sm:$0xff] %vm98, 0.0
    %s107 = sld [smem:[#allocation3 + $0x8]]
    %s108 = sld [smem:[#allocation3 + $0x7]]
    %s109 = sld [smem:[#allocation3 + $0x6]]
    %s110 = sld [smem:[#allocation3 + $0x5]]
    %s111 = sld [smem:[#allocation3 + $0x4]]
    %s112 = sld [smem:[#allocation3 + $0x3]]
    %s113 = sld [smem:[#allocation3 + $0x2]]
    %s114 = sld [smem:[#allocation3 + $0x1]]
    %s115 = sld [smem:[#allocation3]]
    %v116 = vld [vmem:[#allocation2] sm:$0xff]
    %v117 = vld [vmem:[#allocation2 + $0x8] sm:$0xff]
    %v118 = vld [vmem:[#allocation2 + $0x10] sm:$0xff]
    %v119 = vld [vmem:[#allocation2 + $0x18] sm:$0xff]
    %v120 = vld [vmem:[#allocation2 + $0x20] sm:$0x3]
    %v121 = vld [vmem:[#allocation2 + $0x28] sm:$0xff]
    %v122 = vld [vmem:[#allocation2 + $0x30] sm:$0xff]
    %v123 = vld [vmem:[#allocation2 + $0x38] sm:$0xff]
    %v124 = vld [vmem:[#allocation2 + $0x40] sm:$0xff]
    %v125 = vld [vmem:[#allocation2 + $0x48] sm:$0x3]
    %v126 = vstv %s107
    %v127 = vmul.f32 %v116, %v126
    %v128 = vmul.f32 %v117, %v126
    %v129 = vmul.f32 %v118, %v126
    %v130 = vmul.f32 %v119, %v126
    %v131 = vmul.f32 %v120, %v126
    %v132 = vmul.f32 %v121, %v126
    %v133 = vmul.f32 %v122, %v126
    %v134 = vmul.f32 %v123, %v126
    %v135 = vmul.f32 %v124, %v126
    %v136 = vmul.f32 %v125, %v126
    %v137 = vstv %s108
    %v138 = vmul.f32 %v116, %v137
    %v139 = vmul.f32 %v117, %v137
    %v140 = vmul.f32 %v118, %v137
    %v141 = vmul.f32 %v119, %v137
    %v142 = vmul.f32 %v120, %v137
    %v143 = vmul.f32 %v121, %v137
    %v144 = vmul.f32 %v122, %v137
    %v145 = vmul.f32 %v123, %v137
    %v146 = vmul.f32 %v124, %v137
    %v147 = vmul.f32 %v125, %v137
    %158 = vrot.lane.b32.xlu0 %v138, 127
    %v159 = vpop.permute.xlu0 %158
    %160 = vrot.lane.b32.xlu0 %v139, 127
    %v161 = vpop.permute.xlu0 %160
    %162 = vrot.lane.b32.xlu0 %v140, 127
    %v163 = vpop.permute.xlu0 %162
    %164 = vrot.lane.b32.xlu0 %v141, 127
    %v165 = vpop.permute.xlu0 %164
    %166 = vrot.lane.b32.xlu0 %v142, 127
    %v167 = vpop.permute.xlu0 %166
    %168 = vrot.lane.b32.xlu0 %v143, 127
    %v169 = vpop.permute.xlu0 %168
    %170 = vrot.lane.b32.xlu0 %v144, 127
    %v171 = vpop.permute.xlu0 %170
    %172 = vrot.lane.b32.xlu0 %v145, 127
    %v173 = vpop.permute.xlu0 %172
    %174 = vrot.lane.b32.xlu0 %v146, 127
    %v175 = vpop.permute.xlu0 %174
    %176 = vrot.lane.b32.xlu0 %v147, 127
    %v177 = vpop.permute.xlu0 %176
    %v188 = vadd.f32 %v127, %v159
    %v189 = vadd.f32 %v128, %v161
    %v190 = vadd.f32 %v129, %v163
    %v191 = vadd.f32 %v130, %v165
    %v192 = vadd.f32 %v131, %v167
    %v193 = vadd.f32 %v132, %v169
    %v194 = vadd.f32 %v133, %v171
    %v195 = vadd.f32 %v134, %v173
    %v196 = vadd.f32 %v135, %v175
    %v197 = vadd.f32 %v136, %v177
    %v198 = vstv %s109
    %v199 = vmul.f32 %v116, %v198
    %v200 = vmul.f32 %v117, %v198
    %v201 = vmul.f32 %v118, %v198
    %v202 = vmul.f32 %v119, %v198
    %v203 = vmul.f32 %v120, %v198
    %v204 = vmul.f32 %v121, %v198
    %v205 = vmul.f32 %v122, %v198
    %v206 = vmul.f32 %v123, %v198
    %v207 = vmul.f32 %v124, %v198
    %v208 = vmul.f32 %v125, %v198
    %219 = vrot.lane.b32.xlu0 %v199, 126
    %v220 = vpop.permute.xlu0 %219
    %221 = vrot.lane.b32.xlu0 %v200, 126
    %v222 = vpop.permute.xlu0 %221
    %223 = vrot.lane.b32.xlu0 %v201, 126
    %v224 = vpop.permute.xlu0 %223
    %225 = vrot.lane.b32.xlu0 %v202, 126
    %v226 = vpop.permute.xlu0 %225
    %227 = vrot.lane.b32.xlu0 %v203, 126
    %v228 = vpop.permute.xlu0 %227
    %229 = vrot.lane.b32.xlu0 %v204, 126
    %v230 = vpop.permute.xlu0 %229
    %231 = vrot.lane.b32.xlu0 %v205, 126
    %v232 = vpop.permute.xlu0 %231
    %233 = vrot.lane.b32.xlu0 %v206, 126
    %v234 = vpop.permute.xlu0 %233
    %235 = vrot.lane.b32.xlu0 %v207, 126
    %v236 = vpop.permute.xlu0 %235
    %237 = vrot.lane.b32.xlu0 %v208, 126
    %v238 = vpop.permute.xlu0 %237
    %v249 = vadd.f32 %v188, %v220
    %v250 = vadd.f32 %v189, %v222
    %v251 = vadd.f32 %v190, %v224
    %v252 = vadd.f32 %v191, %v226
    %v253 = vadd.f32 %v192, %v228
    %v254 = vadd.f32 %v193, %v230
    %v255 = vadd.f32 %v194, %v232
    %v256 = vadd.f32 %v195, %v234
    %v257 = vadd.f32 %v196, %v236
    %v258 = vadd.f32 %v197, %v238
    %v259 = vld [vmem:[#allocation2 + $0x1] sm:$0xff]
    %v260 = vld [vmem:[#allocation2 + $0x9] sm:$0xff]
    %v261 = vld [vmem:[#allocation2 + $0x11] sm:$0xff]
    %v262 = vld [vmem:[#allocation2 + $0x19] sm:$0xff]
    %v263 = vld [vmem:[#allocation2 + $0x21] sm:$0x3]
    %v264 = vld [vmem:[#allocation2 + $0x29] sm:$0xff]
    %v265 = vld [vmem:[#allocation2 + $0x31] sm:$0xff]
    %v266 = vld [vmem:[#allocation2 + $0x39] sm:$0xff]
    %v267 = vld [vmem:[#allocation2 + $0x41] sm:$0xff]
    %v268 = vld [vmem:[#allocation2 + $0x49] sm:$0x3]
    %v269 = vstv %s110
    %v270 = vmul.f32 %v259, %v269
    %v271 = vmul.f32 %v260, %v269
    %v272 = vmul.f32 %v261, %v269
    %v273 = vmul.f32 %v262, %v269
    %v274 = vmul.f32 %v263, %v269
    %v275 = vmul.f32 %v264, %v269
    %v276 = vmul.f32 %v265, %v269
    %v277 = vmul.f32 %v266, %v269
    %v278 = vmul.f32 %v267, %v269
    %v279 = vmul.f32 %v268, %v269
    %v280 = vadd.f32 %v249, %v270
    %v281 = vadd.f32 %v250, %v271
    %v282 = vadd.f32 %v251, %v272
    %v283 = vadd.f32 %v252, %v273
    %v284 = vadd.f32 %v253, %v274
    %v285 = vadd.f32 %v254, %v275
    %v286 = vadd.f32 %v255, %v276
    %v287 = vadd.f32 %v256, %v277
    %v288 = vadd.f32 %v257, %v278
    %v289 = vadd.f32 %v258, %v279
    %v290 = vstv %s111
    %v291 = vmul.f32 %v259, %v290
    %v292 = vmul.f32 %v260, %v290
    %v293 = vmul.f32 %v261, %v290
    %v294 = vmul.f32 %v262, %v290
    %v295 = vmul.f32 %v263, %v290
    %v296 = vmul.f32 %v264, %v290
    %v297 = vmul.f32 %v265, %v290
    %v298 = vmul.f32 %v266, %v290
    %v299 = vmul.f32 %v267, %v290
    %v300 = vmul.f32 %v268, %v290
    %311 = vrot.lane.b32.xlu0 %v291, 127
    %v312 = vpop.permute.xlu0 %311
    %313 = vrot.lane.b32.xlu0 %v292, 127
    %v314 = vpop.permute.xlu0 %313
    %315 = vrot.lane.b32.xlu0 %v293, 127
    %v316 = vpop.permute.xlu0 %315
    %317 = vrot.lane.b32.xlu0 %v294, 127
    %v318 = vpop.permute.xlu0 %317
    %319 = vrot.lane.b32.xlu0 %v295, 127
    %v320 = vpop.permute.xlu0 %319
    %321 = vrot.lane.b32.xlu0 %v296, 127
    %v322 = vpop.permute.xlu0 %321
    %323 = vrot.lane.b32.xlu0 %v297, 127
    %v324 = vpop.permute.xlu0 %323
    %325 = vrot.lane.b32.xlu0 %v298, 127
    %v326 = vpop.permute.xlu0 %325
    %327 = vrot.lane.b32.xlu0 %v299, 127
    %v328 = vpop.permute.xlu0 %327
    %329 = vrot.lane.b32.xlu0 %v300, 127
    %v330 = vpop.permute.xlu0 %329
    %v341 = vadd.f32 %v280, %v312
    %v342 = vadd.f32 %v281, %v314
    %v343 = vadd.f32 %v282, %v316
    %v344 = vadd.f32 %v283, %v318
    %v345 = vadd.f32 %v284, %v320
    %v346 = vadd.f32 %v285, %v322
    %v347 = vadd.f32 %v286, %v324
    %v348 = vadd.f32 %v287, %v326
    %v349 = vadd.f32 %v288, %v328
    %v350 = vadd.f32 %v289, %v330
    %v351 = vstv %s112
    %v352 = vmul.f32 %v259, %v351
    %v353 = vmul.f32 %v260, %v351
    %v354 = vmul.f32 %v261, %v351
    %v355 = vmul.f32 %v262, %v351
    %v356 = vmul.f32 %v263, %v351
    %v357 = vmul.f32 %v264, %v351
    %v358 = vmul.f32 %v265, %v351
    %v359 = vmul.f32 %v266, %v351
    %v360 = vmul.f32 %v267, %v351
    %v361 = vmul.f32 %v268, %v351
    %372 = vrot.lane.b32.xlu0 %v352, 126
    %v373 = vpop.permute.xlu0 %372
    %374 = vrot.lane.b32.xlu0 %v353, 126
    %v375 = vpop.permute.xlu0 %374
    %376 = vrot.lane.b32.xlu0 %v354, 126
    %v377 = vpop.permute.xlu0 %376
    %378 = vrot.lane.b32.xlu0 %v355, 126
    %v379 = vpop.permute.xlu0 %378
    %380 = vrot.lane.b32.xlu0 %v356, 126
    %v381 = vpop.permute.xlu0 %380
    %382 = vrot.lane.b32.xlu0 %v357, 126
    %v383 = vpop.permute.xlu0 %382
    %384 = vrot.lane.b32.xlu0 %v358, 126
    %v385 = vpop.permute.xlu0 %384
    %386 = vrot.lane.b32.xlu0 %v359, 126
    %v387 = vpop.permute.xlu0 %386
    %388 = vrot.lane.b32.xlu0 %v360, 126
    %v389 = vpop.permute.xlu0 %388
    %390 = vrot.lane.b32.xlu0 %v361, 126
    %v391 = vpop.permute.xlu0 %390
    %v402 = vadd.f32 %v341, %v373
    %v403 = vadd.f32 %v342, %v375
    %v404 = vadd.f32 %v343, %v377
    %v405 = vadd.f32 %v344, %v379
    %v406 = vadd.f32 %v345, %v381
    %v407 = vadd.f32 %v346, %v383
    %v408 = vadd.f32 %v347, %v385
    %v409 = vadd.f32 %v348, %v387
    %v410 = vadd.f32 %v349, %v389
    %v411 = vadd.f32 %v350, %v391
    %v412 = vld [vmem:[#allocation2 + $0x2] sm:$0xff]
    %v413 = vld [vmem:[#allocation2 + $0xa] sm:$0xff]
    %v414 = vld [vmem:[#allocation2 + $0x12] sm:$0xff]
    %v415 = vld [vmem:[#allocation2 + $0x1a] sm:$0xff]
    %v416 = vld [vmem:[#allocation2 + $0x22] sm:$0x3]
    %v417 = vld [vmem:[#allocation2 + $0x2a] sm:$0xff]
    %v418 = vld [vmem:[#allocation2 + $0x32] sm:$0xff]
    %v419 = vld [vmem:[#allocation2 + $0x3a] sm:$0xff]
    %v420 = vld [vmem:[#allocation2 + $0x42] sm:$0xff]
    %v421 = vld [vmem:[#allocation2 + $0x4a] sm:$0x3]
    %v422 = vstv %s113
    %v423 = vmul.f32 %v412, %v422
    %v424 = vmul.f32 %v413, %v422
    %v425 = vmul.f32 %v414, %v422
    %v426 = vmul.f32 %v415, %v422
    %v427 = vmul.f32 %v416, %v422
    %v428 = vmul.f32 %v417, %v422
    %v429 = vmul.f32 %v418, %v422
    %v430 = vmul.f32 %v419, %v422
    %v431 = vmul.f32 %v420, %v422
    %v432 = vmul.f32 %v421, %v422
    %v433 = vadd.f32 %v402, %v423
    %v434 = vadd.f32 %v403, %v424
    %v435 = vadd.f32 %v404, %v425
    %v436 = vadd.f32 %v405, %v426
    %v437 = vadd.f32 %v406, %v427
    %v438 = vadd.f32 %v407, %v428
    %v439 = vadd.f32 %v408, %v429
    %v440 = vadd.f32 %v409, %v430
    %v441 = vadd.f32 %v410, %v431
    %v442 = vadd.f32 %v411, %v432
    %v443 = vstv %s114
    %v444 = vmul.f32 %v412, %v443
    %v445 = vmul.f32 %v413, %v443
    %v446 = vmul.f32 %v414, %v443
    %v447 = vmul.f32 %v415, %v443
    %v448 = vmul.f32 %v416, %v443
    %v449 = vmul.f32 %v417, %v443
    %v450 = vmul.f32 %v418, %v443
    %v451 = vmul.f32 %v419, %v443
    %v452 = vmul.f32 %v420, %v443
    %v453 = vmul.f32 %v421, %v443
    %464 = vrot.lane.b32.xlu0 %v444, 127
    %v465 = vpop.permute.xlu0 %464
    %466 = vrot.lane.b32.xlu0 %v445, 127
    %v467 = vpop.permute.xlu0 %466
    %468 = vrot.lane.b32.xlu0 %v446, 127
    %v469 = vpop.permute.xlu0 %468
    %470 = vrot.lane.b32.xlu0 %v447, 127
    %v471 = vpop.permute.xlu0 %470
    %472 = vrot.lane.b32.xlu0 %v448, 127
    %v473 = vpop.permute.xlu0 %472
    %474 = vrot.lane.b32.xlu0 %v449, 127
    %v475 = vpop.permute.xlu0 %474
    %476 = vrot.lane.b32.xlu0 %v450, 127
    %v477 = vpop.permute.xlu0 %476
    %478 = vrot.lane.b32.xlu0 %v451, 127
    %v479 = vpop.permute.xlu0 %478
    %480 = vrot.lane.b32.xlu0 %v452, 127
    %v481 = vpop.permute.xlu0 %480
    %482 = vrot.lane.b32.xlu0 %v453, 127
    %v483 = vpop.permute.xlu0 %482
    %v494 = vadd.f32 %v433, %v465
    %v495 = vadd.f32 %v434, %v467
    %v496 = vadd.f32 %v435, %v469
    %v497 = vadd.f32 %v436, %v471
    %v498 = vadd.f32 %v437, %v473
    %v499 = vadd.f32 %v438, %v475
    %v500 = vadd.f32 %v439, %v477
    %v501 = vadd.f32 %v440, %v479
    %v502 = vadd.f32 %v441, %v481
    %v503 = vadd.f32 %v442, %v483
    %v504 = vstv %s115
    %v505 = vmul.f32 %v412, %v504
    %v506 = vmul.f32 %v413, %v504
    %v507 = vmul.f32 %v414, %v504
    %v508 = vmul.f32 %v415, %v504
    %v509 = vmul.f32 %v416, %v504
    %v510 = vmul.f32 %v417, %v504
    %v511 = vmul.f32 %v418, %v504
    %v512 = vmul.f32 %v419, %v504
    %v513 = vmul.f32 %v420, %v504
    %v514 = vmul.f32 %v421, %v504
    %525 = vrot.lane.b32.xlu0 %v505, 126
    %v526 = vpop.permute.xlu0 %525
    %527 = vrot.lane.b32.xlu0 %v506, 126
    %v528 = vpop.permute.xlu0 %527
    %529 = vrot.lane.b32.xlu0 %v507, 126
    %v530 = vpop.permute.xlu0 %529
    %531 = vrot.lane.b32.xlu0 %v508, 126
    %v532 = vpop.permute.xlu0 %531
    %533 = vrot.lane.b32.xlu0 %v509, 126
    %v534 = vpop.permute.xlu0 %533
    %535 = vrot.lane.b32.xlu0 %v510, 126
    %v536 = vpop.permute.xlu0 %535
    %537 = vrot.lane.b32.xlu0 %v511, 126
    %v538 = vpop.permute.xlu0 %537
    %539 = vrot.lane.b32.xlu0 %v512, 126
    %v540 = vpop.permute.xlu0 %539
    %541 = vrot.lane.b32.xlu0 %v513, 126
    %v542 = vpop.permute.xlu0 %541
    %543 = vrot.lane.b32.xlu0 %v514, 126
    %v544 = vpop.permute.xlu0 %543
    %v555 = vadd.f32 %v494, %v526
    %v556 = vadd.f32 %v495, %v528
    %v557 = vadd.f32 %v496, %v530
    %v558 = vadd.f32 %v497, %v532
    %v559 = vadd.f32 %v498, %v534
    %v560 = vadd.f32 %v499, %v536
    %v561 = vadd.f32 %v500, %v538
    %v562 = vadd.f32 %v501, %v540
    %v563 = vadd.f32 %v502, %v542
    %v564 = vadd.f32 %v503, %v544
    %vm565 = vcmask 277504
    %566 = vst.msk [vmem:[%s2] sm:$0xff] %vm565, %v555
    %567 = vst.msk [vmem:[%s2 + $0x8] sm:$0xff] %vm565, %v556
    %568 = vst.msk [vmem:[%s2 + $0x10] sm:$0xff] %vm565, %v557
    %569 = vst.msk [vmem:[%s2 + $0x18] sm:$0xff] %vm565, %v558
    %vm570 = vcmask 271360
    %571 = vst.msk [vmem:[%s2 + $0x20] sm:$0x3] %vm570, %v559
    %572 = vst.msk [vmem:[%s2 + $0x28] sm:$0xff] %vm565, %v560
    %573 = vst.msk [vmem:[%s2 + $0x30] sm:$0xff] %vm565, %v561
    %574 = vst.msk [vmem:[%s2 + $0x38] sm:$0xff] %vm565, %v562
    %575 = vst.msk [vmem:[%s2 + $0x40] sm:$0xff] %vm565, %v563
    %576 = vst.msk [vmem:[%s2 + $0x48] sm:$0x3] %vm570, %v564
    // Predicated region
    $region18: #{tpu_custom_call.1} parent=1 // pred_check
      _
    $region19: #{tpu_custom_call.1} parent=1 // pred_check_branch
      %578 = sbr.rel (0) target = $region21
    $region20: #{tpu_custom_call.1} parent=1 // pred_region
      _
    $region21: #{tpu_custom_call.1} parent=1 // pred_fallthru
      _
    // Predicated region
    $region22: #{tpu_custom_call.1} parent=1 // pred_check
      _
    $region23: #{tpu_custom_call.1} parent=1 // pred_check_branch
      %580 = sbr.rel (0) target = $region25
    $region24: #{tpu_custom_call.1} parent=1 // pred_region
      _
    $region25: #{tpu_custom_call.1} parent=1 // pred_fallthru
      _
    %581 = vsyncpa [#allocation4], 1
    %582 = vsyncpa [#allocation5], 1

</llo_original>
